<compile_context>
chip_gen: v5e
topology: v5e:2x2
jax: 0.10.0
libtpu: 0.0.40
codegen_flags: <defaults>
</compile_context>

<pallas_src>
import jax
import jax.numpy as jnp
from jax.experimental import pallas as pl
from jax.experimental.pallas import tpu as pltpu


def _fusion_kernel(x_ref, y_ref, o_ref):
    x = x_ref[...]
    y = y_ref[...]
    diff = x - y
    s = x + y
    o_ref[...] = -(diff * diff) + jnp.maximum(s, jnp.zeros_like(s))


_SMALL_BYTES = 2 << 20                       # single-block fast path threshold
_LANE_CANDIDATES = (4096, 2048, 1024, 512, 256, 128)


def _vmem_capacity_bytes():
    """Best-effort per-core VMEM capacity; conservative fallback = v7x (64 MiB)."""
    try:
        info = pltpu.get_tpu_info()
        cap = getattr(info, "vmem_capacity_bytes", None)
        if cap:
            return int(cap)
    except Exception:
        pass
    return 64 << 20


def _pick_lane(n):
    for lane in _LANE_CANDIDATES:
        if n % lane == 0:
            return lane
    return None


def fusion(x, y):
    """Elementwise fusion kernel: -(x - y)**2 + relu(x + y)."""
    assert x.shape == y.shape and x.dtype == y.dtype
    orig_shape = x.shape
    n = x.size
    itemsize = jnp.dtype(x.dtype).itemsize
    nbytes = n * itemsize

    # ---------- small-input fast path: one full-array block, no grid ----------
    if nbytes <= _SMALL_BYTES:
        if n % 128 == 0:
            slab = (n // 128, 128)           # lane-dense 2-D slab
        else:
            slab = (1, n)                    # full-dims block bypasses (8,128) rule
        out = pl.pallas_call(
            _fusion_kernel,
            out_shape=jax.ShapeDtypeStruct(slab, x.dtype),
        )(x.reshape(slab), y.reshape(slab))
        return out.reshape(orig_shape)

    # ---------- large-input path: wide lane-dense slab, multi-MiB blocks ------
    lane = _pick_lane(n)
    if lane is None:
        # Rare fallback (element count not divisible by 128): pad flat vector.
        lane = 512
        pad = (-n) % lane
        xf = jnp.pad(x.reshape(-1), (0, pad)).reshape(-1, lane)
        yf = jnp.pad(y.reshape(-1), (0, pad)).reshape(-1, lane)
        trim = True
    else:
        xf = x.reshape(-1, lane)
        yf = y.reshape(-1, lane)
        trim = False
    rows = xf.shape[0]

    vmem_cap = _vmem_capacity_bytes()
    # ~8 MiB blocks when VMEM is plentiful (v5e/v6e: 128 MiB), ~4 MiB on v7x.
    block_bytes = (8 << 20) if vmem_cap >= (100 << 20) else (4 << 20)
    block_rows = (block_bytes // (lane * itemsize)) // 8 * 8
    block_rows = max(8, block_rows)
    if block_rows >= rows:
        block_rows = rows                    # whole array as one block
    num_blocks = pl.cdiv(rows, block_rows)

    # 3 arrays x 2 pipeline buffers x block must fit; leave headroom under
    # the per-generation physical VMEM.
    vmem_limit = min(int(vmem_cap * 3 // 4), 96 << 20)

    out = pl.pallas_call(
        _fusion_kernel,
        out_shape=jax.ShapeDtypeStruct((rows, lane), x.dtype),
        grid_spec=pl.GridSpec(
            grid=(num_blocks,),
            in_specs=[
                pl.BlockSpec((block_rows, lane), lambda i: (i, 0)),
                pl.BlockSpec((block_rows, lane), lambda i: (i, 0)),
            ],
            out_specs=pl.BlockSpec((block_rows, lane), lambda i: (i, 0)),
        ),
        compiler_params=pltpu.CompilerParams(
            dimension_semantics=("parallel",),
            vmem_limit_bytes=vmem_limit,
        ),
    )(xf, yf)

    if trim:
        return out.reshape(-1)[:n].reshape(orig_shape)
    return out.reshape(orig_shape)


def fusion_ref(x, y):
    return -(x - y) ** 2 + jnp.maximum(x + y, 0.0)


if __name__ == "__main__":
    key = jax.random.PRNGKey(0)
    kx, ky = jax.random.split(key)

    # Module test shape (NCHW, as in the PyTorch usage): small fast path.
    shape = (2, 4, 16, 16)
    x = jax.random.normal(kx, shape, dtype=jnp.float32)
    y = jax.random.normal(ky, shape, dtype=jnp.float32)
    out = jax.block_until_ready(fusion(x, y))
    ref = fusion_ref(x, y)
    assert out.shape == ref.shape and out.dtype == ref.dtype
    assert jnp.allclose(out, ref, atol=1e-5, rtol=1e-5)

    # Also exercise the gridded large-block path once.
    kx2, ky2 = jax.random.split(jax.random.PRNGKey(1))
    big = (1024, 4096)
    xb = jax.random.normal(kx2, big, dtype=jnp.float32)
    yb = jax.random.normal(ky2, big, dtype=jnp.float32)
    outb = jax.block_until_ready(fusion(xb, yb))
    refb = fusion_ref(xb, yb)
    assert jnp.allclose(outb, refb, atol=1e-5, rtol=1e-5)

    print("KERNEL_OK")
</pallas_src>

<mosaic_0001>
module attributes {stable_mosaic.version = 11 : i64} {
  func.func @_fusion_kernel(%arg0: memref<16x128xf32, #tpu.memory_space<vmem>>, %arg1: memref<16x128xf32, #tpu.memory_space<vmem>>, %arg2: memref<16x128xf32, #tpu.memory_space<vmem>>) attributes {dimension_semantics = [], scalar_prefetch = 0 : i64, scratch_operands = 0 : i64, tpu.core_type = #tpu.core_type<tc>} {
    %c0 = arith.constant 0 : index
    %c0_0 = arith.constant 0 : index
    %0 = vector.load %arg0[%c0, %c0_0] : memref<16x128xf32, #tpu.memory_space<vmem>>, vector<16x128xf32>
    %c0_1 = arith.constant 0 : index
    %c0_2 = arith.constant 0 : index
    %1 = vector.load %arg1[%c0_1, %c0_2] : memref<16x128xf32, #tpu.memory_space<vmem>>, vector<16x128xf32>
    %2 = arith.subf %0, %1 : vector<16x128xf32>
    %3 = arith.addf %0, %1 : vector<16x128xf32>
    %4 = arith.mulf %2, %2 : vector<16x128xf32>
    %cst = arith.constant 0.000000e+00 : f32
    %5 = vector.broadcast %cst : f32 to vector<16x128xf32>
    %6 = arith.subf %5, %4 : vector<16x128xf32>
    %cst_3 = arith.constant 0.000000e+00 : f32
    %7 = vector.broadcast %cst_3 : f32 to vector<16x128xf32>
    %8 = arith.maximumf %3, %7 : vector<16x128xf32>
    %9 = arith.addf %6, %8 : vector<16x128xf32>
    %c0_4 = arith.constant 0 : index
    %c0_5 = arith.constant 0 : index
    %10 = vector.load %arg2[%c0_4, %c0_5] : memref<16x128xf32, #tpu.memory_space<vmem>>, vector<16x128xf32>
    tpu.vector_store %arg2[%c0_4, %c0_5], %9 {strides = array<i32>} : memref<16x128xf32, #tpu.memory_space<vmem>>, vector<16x128xf32>,
    return
  }
}

</mosaic_0001>

<llo_original>
// kernel: tpu_custom_call.1
$region0: #{tpu_custom_call.1}
  #allocation0 [shape = 'u32[]', space=smem, size = 0x4, offset = 0x4, fixed_abs, tag = 'smem constant byte address 0x4 - core index']
  #allocation1 [shape = 'u32[72,128]{1,0:T(1,128)}', space=vmem, size = 0x9000, scoped, tag = 'internal scratch']
  %s0 = inlined_call_operand.hbm [shape: f32[16,128], index: 0, kind: input, shape index: {}]
  %s1 = inlined_call_operand.hbm [shape: f32[16,128], index: 1, kind: input, shape index: {}]
  %s2 = inlined_call_operand.hbm [shape: f32[16,128], index: 2, kind: output, shape index: {}]
  %s3 = sld [smem:[#allocation0]]
  $region26: #{tpu_custom_call.1} parent=0
    _
  %s5 = ssub.s32 1, %s3
  %s6 = scalar_select 0, %s5, %s3
  $region1: #{tpu_custom_call.1} parent=0
    #allocation2 [shape = 'u8[8192]{0}', space=vmem, size = 0x2000, scoped, tag = 'input window, operand 0, single buffered']
    #allocation3 [shape = 's32[1]{0}', space=sflag, size = 0x4, scoped, tag = 'scoped memory for tpu_custom_call.1']
    #allocation4 [shape = 's32[1]{0}', space=sflag, size = 0x4, scoped, tag = 'scoped memory for tpu_custom_call.1']
    #allocation5 [shape = 'u8[8192]{0}', space=vmem, size = 0x2000, scoped, tag = 'input window, operand 1, single buffered']
    #allocation6 [shape = 's32[1]{0}', space=sflag, size = 0x4, scoped, tag = 'scoped memory for tpu_custom_call.1']
    #allocation7 [shape = 'u8[8192]{0}', space=vmem, size = 0x2000, scoped, tag = 'output window, operand 0, single buffered']
    %7 = vsyncpa [#allocation3], 0
    %8 = vsyncpa [#allocation6], 0
    %9 = vsyncpa [#allocation4], 0
    // Predicated region
    $region2: #{tpu_custom_call.1} parent=1 // pred_check
      _
    $region3: #{tpu_custom_call.1} parent=1 // pred_check_branch
      %11 = sbr.rel (0) target = $region5
    $region4: #{tpu_custom_call.1} parent=1 // pred_region
      %13 = vsyncadd [#allocation3], 0
      %s14 = sshll.u32 %s0, 4
      %s15 = int_to_ptr.hbm [resolvable:$true] %s14
      %s16 = sshll.u32 [#allocation2], 4
      %s17 = int_to_ptr.vmem [resolvable:$true] %s16
      %22 = dma.hbm_to_vmem [thread:$0]  %s15, 256, %s17, [#allocation3], 128, 128, 8
    $region5: #{tpu_custom_call.1} parent=1 // pred_fallthru
      _
    // Predicated region
    $region6: #{tpu_custom_call.1} parent=1 // pred_check
      _
    $region7: #{tpu_custom_call.1} parent=1 // pred_check_branch
      %24 = sbr.rel (0) target = $region9
    $region8: #{tpu_custom_call.1} parent=1 // pred_region
      %26 = vsyncadd [#allocation6], 0
      %s27 = sshll.u32 %s1, 4
      %s28 = int_to_ptr.hbm [resolvable:$true] %s27
      %s29 = sshll.u32 [#allocation5], 4
      %s30 = int_to_ptr.vmem [resolvable:$true] %s29
      %35 = dma.hbm_to_vmem [thread:$0]  %s28, 256, %s30, [#allocation6], 128, 128, 8
    $region9: #{tpu_custom_call.1} parent=1 // pred_fallthru
      _
    // Predicated region
    $region10: #{tpu_custom_call.1} parent=1 // pred_check
      _
    $region11: #{tpu_custom_call.1} parent=1 // pred_check_branch
      %37 = sbr.rel (0) target = $region13
    $region12: #{tpu_custom_call.1} parent=1 // pred_region
      %39 = dma.done [#allocation3], 256
    $region13: #{tpu_custom_call.1} parent=1 // pred_fallthru
      _
    // Predicated region
    $region14: #{tpu_custom_call.1} parent=1 // pred_check
      _
    $region15: #{tpu_custom_call.1} parent=1 // pred_check_branch
      %41 = sbr.rel (0) target = $region17
    $region16: #{tpu_custom_call.1} parent=1 // pred_region
      %43 = dma.done [#allocation6], 256
    $region17: #{tpu_custom_call.1} parent=1 // pred_fallthru
      _
    %v44 = vld [vmem:[#allocation2] sm:$0xff]
    %v45 = vld [vmem:[#allocation2 + $0x8] sm:$0xff]
    %v46 = vld [vmem:[#allocation5] sm:$0xff]
    %v47 = vld [vmem:[#allocation5 + $0x8] sm:$0xff]
    %v48 = vsub.f32 %v44, %v46
    %v49 = vsub.f32 %v45, %v47
    %v50 = vadd.f32 %v44, %v46
    %v51 = vadd.f32 %v45, %v47
    %v52 = vmul.f32 %v48, %v48
    %v53 = vmul.f32 %v49, %v49
    %v54 = vsub.f32 0.0, %v52
    %v55 = vsub.f32 0.0, %v53
    %v56 = vmax.f32 %v50, 0.0
    %v57 = vmax.f32 %v51, 0.0
    %v58 = vadd.f32 %v54, %v56
    %v59 = vadd.f32 %v55, %v57
    %60 = vst [vmem:[#allocation7] sm:$0xff] %v58
    %61 = vst [vmem:[#allocation7 + $0x8] sm:$0xff] %v59
    // Predicated region
    $region18: #{tpu_custom_call.1} parent=1 // pred_check
      _
    $region19: #{tpu_custom_call.1} parent=1 // pred_check_branch
      %63 = sbr.rel (0) target = $region21
    $region20: #{tpu_custom_call.1} parent=1 // pred_region
      %65 = vsyncadd [#allocation4], 0
      %s66 = sshll.u32 [#allocation7], 4
      %s67 = int_to_ptr.vmem [resolvable:$true] %s66
      %s68 = sshll.u32 %s2, 4
      %s69 = int_to_ptr.hbm [resolvable:$true] %s68
      %74 = dma.vmem_to_hbm [thread:$0]  %s67, 256, %s69, [#allocation4], 128, 128, 8
    $region21: #{tpu_custom_call.1} parent=1 // pred_fallthru
      _
    // Predicated region
    $region22: #{tpu_custom_call.1} parent=1 // pred_check
      _
    $region23: #{tpu_custom_call.1} parent=1 // pred_check_branch
      %76 = sbr.rel (0) target = $region25
    $region24: #{tpu_custom_call.1} parent=1 // pred_region
      %78 = dma.done [#allocation4], 256
    $region25: #{tpu_custom_call.1} parent=1 // pred_fallthru
      _
    %79 = vsyncpa [#allocation3], 1
    %80 = vsyncpa [#allocation6], 1
    %81 = vsyncpa [#allocation4], 1

</llo_original>
